<compile_context>
chip_gen: v6e
topology: v6e:2x2x1
jax: 0.10.0
libtpu: 0.0.40
codegen_flags: <defaults>
</compile_context>

<pallas_src>
import jax
import jax.numpy as jnp
from jax.experimental import pallas as pl
from jax.experimental.pallas import tpu as pltpu


def _round_up(n: int, m: int) -> int:
    return ((n + m - 1) // m) * m


def _sigmoid(x):
    # Single EUP op (tanh); exact sigmoid (no approx-reciprocal accuracy loss).
    return 0.5 * jnp.tanh(0.5 * x) + 0.5


def simplenet_kernel(x_ref, w1_ref, b1_ref, w2_ref, b2_ref, y_ref):
    x = x_ref[...]                       # (TB, D_in)   f32
    w1 = w1_ref[...]                     # (D_in, H)    f32 or bf16
    b1 = b1_ref[...]                     # (1, H)       f32
    w2 = w2_ref[...]                     # (H, D_out)   f32 or bf16
    b2 = b2_ref[...]                     # (1, D_out)   f32

    if x_ref.shape[-1] == 1:
        # D_in == 1: length-1 contraction -> VPU broadcast multiply, no MXU.
        l1 = x * w1.astype(jnp.float32) + b1
    else:
        l1 = jnp.dot(x.astype(w1.dtype), w1,
                     preferred_element_type=jnp.float32) + b1
    a1 = _sigmoid(l1)                    # (TB, H) f32

    l2 = jnp.dot(a1.astype(w2.dtype), w2,
                 preferred_element_type=jnp.float32) + b2
    y_ref[...] = _sigmoid(l2).astype(y_ref.dtype)


def _batch_tiling(B: int):
    """Pick (TB, B_padded, num_grid_steps) for the batch grid."""
    SUBLANE, MAX_TB = 8, 1024
    B_r = _round_up(B, SUBLANE)
    if B_r <= 2 * SUBLANE:
        return B_r, B_r, 1                           # tiny batch: single step
    n_steps = max(2, pl.cdiv(B_r, MAX_TB))           # >=2 steps (v7x dual-TC)
    TB = _round_up(pl.cdiv(B_r, n_steps), SUBLANE)   # ~min(1024, B/2) rows
    return TB, TB * n_steps, n_steps


@jax.jit
def simplenet_forward(x, w1, b1, w2, b2):
    """sigmoid(sigmoid(x @ w1 + b1) @ w2 + b2), x: (B, D_in) -> (B, D_out)."""
    B, D_in = x.shape
    H, D_out = w2.shape

    TB, B_p, n_steps = _batch_tiling(B)

    x = x.astype(jnp.float32)
    if B_p != B:                                     # pad batch only if needed
        x_in = jnp.zeros((B_p, D_in), jnp.float32).at[:B, :].set(x)
    else:
        x_in = x

    cost = pl.CostEstimate(
        flops=2 * B_p * (D_in * H + H * D_out),
        transcendentals=B_p * (H + D_out),
        bytes_accessed=(x_in.dtype.itemsize * B_p * D_in
                        + w1.dtype.itemsize * D_in * H
                        + b1.dtype.itemsize * H
                        + w2.dtype.itemsize * H * D_out
                        + b2.dtype.itemsize * D_out
                        + 4 * B_p * D_out),
    )

    y_p = pl.pallas_call(
        simplenet_kernel,
        out_shape=jax.ShapeDtypeStruct((B_p, D_out), jnp.float32),
        grid=(n_steps,),
        in_specs=[
            # x streamed over the batch grid (double-buffered by Pallas).
            pl.BlockSpec((TB, D_in), lambda i: (i, 0)),
            # Weights & biases: constant block index -> loaded once, resident.
            pl.BlockSpec((D_in, H), lambda i: (0, 0)),
            pl.BlockSpec((1, H), lambda i: (0, 0)),
            pl.BlockSpec((H, D_out), lambda i: (0, 0)),
            pl.BlockSpec((1, D_out), lambda i: (0, 0)),
        ],
        out_specs=pl.BlockSpec((TB, D_out), lambda i: (i, 0)),
        compiler_params=pltpu.CompilerParams(
            # Batch rows independent -> shard grid steps across TCs on v7x.
            dimension_semantics=("parallel",),
        ),
        cost_estimate=cost,
    )(x_in, w1, b1, w2, b2)

    return y_p if B_p == B else y_p[:B, :]


def prepare_params(w1, b1, w2, b2, mxu_dtype=jnp.bfloat16):
    """One-time (init-time) parameter prep -- hoisted out of the per-call path.

    Weights go to the MXU-native dtype when the first layer actually uses the
    MXU (D_in > 1); biases stay f32 (added after f32 accumulation)."""
    d_in = w1.shape[0]
    wdt = mxu_dtype if d_in > 1 else jnp.float32
    return (jnp.asarray(w1, wdt),
            jnp.asarray(b1, jnp.float32).reshape(1, -1),
            jnp.asarray(w2, wdt),
            jnp.asarray(b2, jnp.float32).reshape(1, -1))


def init_params(key, d_in, hidden, d_out):
    """Deterministic init mimicking nn.Linear's U(-1/sqrt(fan_in), +)."""
    k1, k2, k3, k4 = jax.random.split(key, 4)
    bound1 = 1.0 / jnp.sqrt(jnp.float32(d_in))
    bound2 = 1.0 / jnp.sqrt(jnp.float32(hidden))
    w1 = jax.random.uniform(k1, (d_in, hidden), jnp.float32, -bound1, bound1)
    b1 = jax.random.uniform(k2, (1, hidden), jnp.float32, -bound1, bound1)
    w2 = jax.random.uniform(k3, (hidden, d_out), jnp.float32, -bound2, bound2)
    b2 = jax.random.uniform(k4, (1, d_out), jnp.float32, -bound2, bound2)
    return w1, b1, w2, b2


if __name__ == "__main__":
    key = jax.random.PRNGKey(0)
    kx, kp, kx2, kp2 = jax.random.split(key, 4)

    def ref_forward(x, w1, b1, w2, b2):
        # Pure-JAX reference with the same operand dtypes as the kernel.
        l1 = jnp.dot(x.astype(w1.dtype), w1,
                     preferred_element_type=jnp.float32) + b1
        a1 = jax.nn.sigmoid(l1)
        l2 = jnp.dot(a1.astype(w2.dtype), w2,
                     preferred_element_type=jnp.float32) + b2
        return jax.nn.sigmoid(l2)

    # --- Config matching the PyTorch module: SimpleNet(1, 2, 1), batch = 2 ---
    B, D_IN, H, D_OUT = 2, 1, 2, 1
    params = prepare_params(*init_params(kp, D_IN, H, D_OUT))   # f32 (D_in==1)
    x = jax.random.normal(kx, (B, D_IN), jnp.float32)
    x = x.at[0].set(0.0)               # first row mirrors torch.tensor([0.0])

    yhat = simplenet_forward(x, *params)
    jax.block_until_ready(yhat)
    ref = ref_forward(x, *params)
    assert yhat.shape == (B, D_OUT)
    assert jnp.allclose(yhat, ref, atol=1e-5, rtol=1e-5), (yhat, ref)

    # --- Larger config: bf16 MXU path + multi-step ("parallel") batch grid ---
    B2, D_IN2, H2, D_OUT2 = 32, 16, 64, 8
    params2 = prepare_params(*init_params(kp2, D_IN2, H2, D_OUT2))  # bf16 w
    x2 = jax.random.normal(kx2, (B2, D_IN2), jnp.float32)

    yhat2 = simplenet_forward(x2, *params2)
    jax.block_until_ready(yhat2)
    ref2 = ref_forward(x2, *params2)                      # same bf16 casts
    ref2_f32 = ref_forward(x2, *(jnp.asarray(a, jnp.float32) for a in params2))
    assert yhat2.shape == (B2, D_OUT2)
    assert jnp.allclose(yhat2, ref2, atol=1e-4, rtol=1e-4)
    assert jnp.allclose(yhat2, ref2_f32, atol=3e-2)       # bf16-vs-f32 drift

    print("KERNEL_OK")
</pallas_src>

<mosaic_0001>
module attributes {stable_mosaic.version = 11 : i64} {
  func.func @simplenet_kernel(%arg0: i32, %arg1: memref<8x1xf32, #tpu.memory_space<vmem>>, %arg2: memref<1x2xf32, #tpu.memory_space<vmem>>, %arg3: memref<1x2xf32, #tpu.memory_space<vmem>>, %arg4: memref<2x1xf32, #tpu.memory_space<vmem>>, %arg5: memref<1x1xf32, #tpu.memory_space<vmem>>, %arg6: memref<8x1xf32, #tpu.memory_space<vmem>>) attributes {dimension_semantics = [#tpu.dimension_semantics<parallel>], iteration_bounds = array<i64: 1>, scalar_prefetch = 0 : i64, scratch_operands = 0 : i64, tpu.core_type = #tpu.core_type<tc>, window_params = [{transform_indices = @transform_0, window_bounds = array<i64: 8, 1>}, {pipeline_mode = #tpu.pipeline_mode<synchronous>, transform_indices = @transform_1, window_bounds = array<i64: 1, 2>}, {pipeline_mode = #tpu.pipeline_mode<synchronous>, transform_indices = @transform_2, window_bounds = array<i64: 1, 2>}, {pipeline_mode = #tpu.pipeline_mode<synchronous>, transform_indices = @transform_3, window_bounds = array<i64: 2, 1>}, {pipeline_mode = #tpu.pipeline_mode<synchronous>, transform_indices = @transform_4, window_bounds = array<i64: 1, 1>}, {transform_indices = @transform_5, window_bounds = array<i64: 8, 1>}]} {
    %c0 = arith.constant 0 : index
    %c0_0 = arith.constant 0 : index
    %0 = vector.load %arg1[%c0, %c0_0] : memref<8x1xf32, #tpu.memory_space<vmem>>, vector<8x1xf32>
    %c0_1 = arith.constant 0 : index
    %c0_2 = arith.constant 0 : index
    %1 = vector.load %arg2[%c0_1, %c0_2] : memref<1x2xf32, #tpu.memory_space<vmem>>, vector<1x2xf32>
    %c0_3 = arith.constant 0 : index
    %c0_4 = arith.constant 0 : index
    %2 = vector.load %arg3[%c0_3, %c0_4] : memref<1x2xf32, #tpu.memory_space<vmem>>, vector<1x2xf32>
    %c0_5 = arith.constant 0 : index
    %c0_6 = arith.constant 0 : index
    %3 = vector.load %arg4[%c0_5, %c0_6] : memref<2x1xf32, #tpu.memory_space<vmem>>, vector<2x1xf32>
    %c0_7 = arith.constant 0 : index
    %c0_8 = arith.constant 0 : index
    %4 = vector.load %arg5[%c0_7, %c0_8] : memref<1x1xf32, #tpu.memory_space<vmem>>, vector<1x1xf32>
    %5 = vector.broadcast %0 : vector<8x1xf32> to vector<8x2xf32>
    %6 = vector.broadcast %1 : vector<1x2xf32> to vector<8x2xf32>
    %7 = arith.mulf %5, %6 : vector<8x2xf32>
    %8 = vector.broadcast %2 : vector<1x2xf32> to vector<8x2xf32>
    %9 = arith.addf %7, %8 : vector<8x2xf32>
    %cst = arith.constant 5.000000e-01 : f32
    %10 = vector.broadcast %cst : f32 to vector<8x2xf32>
    %11 = arith.mulf %10, %9 : vector<8x2xf32>
    %12 = math.tanh %11 : vector<8x2xf32>
    %cst_9 = arith.constant 5.000000e-01 : f32
    %13 = vector.broadcast %cst_9 : f32 to vector<8x2xf32>
    %14 = arith.mulf %13, %12 : vector<8x2xf32>
    %cst_10 = arith.constant 5.000000e-01 : f32
    %15 = vector.broadcast %cst_10 : f32 to vector<8x2xf32>
    %16 = arith.addf %14, %15 : vector<8x2xf32>
    %cst_11 = arith.constant dense<0.000000e+00> : vector<8x1xf32>
    %17 = tpu.matmul %16, %3, %cst_11 {dimension_numbers = #tpu.dot_dimension_numbers<[1], [0], [0], [1], [0, 0, 1, 1], [], []>} : vector<8x2xf32>, vector<2x1xf32>, vector<8x1xf32> -> vector<8x1xf32>
    %18 = vector.broadcast %4 : vector<1x1xf32> to vector<8x1xf32>
    %19 = arith.addf %17, %18 : vector<8x1xf32>
    %cst_12 = arith.constant 5.000000e-01 : f32
    %20 = vector.broadcast %cst_12 : f32 to vector<8x1xf32>
    %21 = arith.mulf %20, %19 : vector<8x1xf32>
    %22 = math.tanh %21 : vector<8x1xf32>
    %cst_13 = arith.constant 5.000000e-01 : f32
    %23 = vector.broadcast %cst_13 : f32 to vector<8x1xf32>
    %24 = arith.mulf %23, %22 : vector<8x1xf32>
    %cst_14 = arith.constant 5.000000e-01 : f32
    %25 = vector.broadcast %cst_14 : f32 to vector<8x1xf32>
    %26 = arith.addf %24, %25 : vector<8x1xf32>
    %c0_15 = arith.constant 0 : index
    %c0_16 = arith.constant 0 : index
    %27 = vector.load %arg6[%c0_15, %c0_16] : memref<8x1xf32, #tpu.memory_space<vmem>>, vector<8x1xf32>
    tpu.vector_store %arg6[%c0_15, %c0_16], %26 {strides = array<i32>} : memref<8x1xf32, #tpu.memory_space<vmem>>, vector<8x1xf32>,
    return
  }
  func.func @transform_0(%arg0: i32) -> (i32, i32) {
    %c0_i32 = arith.constant 0 : i32
    %c0_i32_0 = arith.constant 0 : i32
    return %arg0, %c0_i32 : i32, i32
  }
  func.func @transform_1(%arg0: i32) -> (i32, i32) {
    %c0_i32 = arith.constant 0 : i32
    %c0_i32_0 = arith.constant 0 : i32
    %c0_i32_1 = arith.constant 0 : i32
    return %c0_i32, %c0_i32_0 : i32, i32
  }
  func.func @transform_2(%arg0: i32) -> (i32, i32) {
    %c0_i32 = arith.constant 0 : i32
    %c0_i32_0 = arith.constant 0 : i32
    %c0_i32_1 = arith.constant 0 : i32
    return %c0_i32, %c0_i32_0 : i32, i32
  }
  func.func @transform_3(%arg0: i32) -> (i32, i32) {
    %c0_i32 = arith.constant 0 : i32
    %c0_i32_0 = arith.constant 0 : i32
    %c0_i32_1 = arith.constant 0 : i32
    return %c0_i32, %c0_i32_0 : i32, i32
  }
  func.func @transform_4(%arg0: i32) -> (i32, i32) {
    %c0_i32 = arith.constant 0 : i32
    %c0_i32_0 = arith.constant 0 : i32
    %c0_i32_1 = arith.constant 0 : i32
    return %c0_i32, %c0_i32_0 : i32, i32
  }
  func.func @transform_5(%arg0: i32) -> (i32, i32) {
    %c0_i32 = arith.constant 0 : i32
    %c0_i32_0 = arith.constant 0 : i32
    return %arg0, %c0_i32 : i32, i32
  }
}

</mosaic_0001>

<llo_original>
// kernel: simplenet_forward.1
$region0: #{simplenet_forward.1}
  #allocation0 [shape = 'u32[]', space=smem, size = 0x4, offset = 0x4, fixed_abs, tag = 'smem constant byte address 0x4 - core index']
  #allocation1 [shape = 'u32[144,128]{1,0:T(1,128)}', space=vmem, size = 0x12000, scoped, tag = 'internal scratch']
  #allocation2 [shape = 'f32[1,1]{1,0:T(1,128)S(1)}', space=vmem, size = 0x200, scoped, tag = 'scoped memory for simplenet_forward.1']
  %s0 = inlined_call_operand.vmem [shape: f32[8,1], index: 0, kind: input, shape index: {}]
  %s1 = inlined_call_operand.vmem [shape: f32[1,2], index: 1, kind: input, shape index: {}]
  %s2 = inlined_call_operand.vmem [shape: f32[1,2], index: 2, kind: input, shape index: {}]
  %s3 = inlined_call_operand.vmem [shape: f32[2,1], index: 3, kind: input, shape index: {}]
  %s4 = inlined_call_operand.<no memory space> [shape: f32[1,1], index: 4, kind: input, shape index: {}]
  %s5 = inlined_call_operand.vmem [shape: f32[8,1], index: 5, kind: output, shape index: {}]
  %s6 = sld [smem:[#allocation0]]
  $region30: #{simplenet_forward.1} parent=0
    _
  %s8 = ssub.s32 1, %s6
  %s9 = scalar_select 0, %s8, %s6
  %v10 = vstv %s4
  %11 = vst [vmem:[#allocation2] sm:$0x1] %v10
  // Predicated region
  $region2: #{simplenet_forward.1} parent=0 // pred_check
    _
  $region3: #{simplenet_forward.1} parent=0 // pred_check_branch
    %13 = sbr.rel (0) target = $region5
  $region4: #{simplenet_forward.1} parent=0 // pred_region
    _
  $region5: #{simplenet_forward.1} parent=0 // pred_fallthru
    _
  // Predicated region
  $region6: #{simplenet_forward.1} parent=0 // pred_check
    _
  $region7: #{simplenet_forward.1} parent=0 // pred_check_branch
    %15 = sbr.rel (0) target = $region9
  $region8: #{simplenet_forward.1} parent=0 // pred_region
    _
  $region9: #{simplenet_forward.1} parent=0 // pred_fallthru
    _
  // Predicated region
  $region10: #{simplenet_forward.1} parent=0 // pred_check
    _
  $region11: #{simplenet_forward.1} parent=0 // pred_check_branch
    %17 = sbr.rel (0) target = $region13
  $region12: #{simplenet_forward.1} parent=0 // pred_region
    _
  $region13: #{simplenet_forward.1} parent=0 // pred_fallthru
    _
  // Predicated region
  $region14: #{simplenet_forward.1} parent=0 // pred_check
    _
  $region15: #{simplenet_forward.1} parent=0 // pred_check_branch
    %19 = sbr.rel (0) target = $region17
  $region16: #{simplenet_forward.1} parent=0 // pred_region
    _
  $region17: #{simplenet_forward.1} parent=0 // pred_fallthru
    _
  // Predicated region
  $region18: #{simplenet_forward.1} parent=0 // pred_check
    _
  $region19: #{simplenet_forward.1} parent=0 // pred_check_branch
    %21 = sbr.rel (0) target = $region21
  $region20: #{simplenet_forward.1} parent=0 // pred_region
    _
  $region21: #{simplenet_forward.1} parent=0 // pred_fallthru
    _
  %v22 = vld [vmem:[%s0] sm:$0xff]
  %v23 = vld [vmem:[%s1] sm:$0x1]
  %v24 = vld [vmem:[%s2] sm:$0x1]
  %v25 = vld [vmem:[%s3] sm:$0x3]
  %v26 = vld [vmem:[#allocation2] sm:$0x1]
  %28 = vset.pattern.permute.xlu0 0
  %29 = vperm.xlu0 %28, %v22
  %v30 = vpop.permute.xlu0 %29
  %v33 = vlaneseq
  %v34 = vshrl.u32 %v33, 7
  %v35 = vsub.s32 0, %v34
  %v36 = vrot.slane %v23, %v35
  %v38 = vmul.f32 %v30, %v36
  %v40 = vlaneseq
  %v41 = vshrl.u32 %v40, 7
  %v42 = vsub.s32 0, %v41
  %v43 = vrot.slane %v24, %v42
  %v45 = vadd.f32 %v38, %v43
  %v46 = vmul.f32 %v45, 0.5
  %v47 = vtanh.pop %v46
  %v48 = vmul.f32 %v47, 0.5
  %v49 = vadd.f32 %v48, 0.5
  %v51 = vlaneseq
  %v52 = vshrl.u32 %v51, 7
  %v53 = vsub.s32 0, %v52
  %v54 = vrot.slane %v26, %v53
  %vm56 = vcmask 15360
  %v58 = vsel %vm56, %v49, 0
  %vm60 = vcmask 1041408
  %v62 = vsel %vm60, %v25, 0
  %64 = vmatprep.subr.mxu0 0.0
  %65 = vmatpush1.msra.mxu0 0.0
  %66 = vmatprep.subr.mxu0 0.0
  %67 = vmatpush1.msra.mxu0 0.0
  %68 = vmatprep.subr.mxu0 0.0
  %69 = vmatpush1.msra.mxu0 0.0
  %70 = vmatprep.subr.mxu0 0.0
  %71 = vmatpush1.msra.mxu0 0.0
  %72 = vmatprep.subr.mxu0 0.0
  %73 = vmatpush1.msra.mxu0 0.0
  %74 = vmatprep.subr.mxu0 0.0
  %75 = vmatpush1.msra.mxu0 0.0
  %76 = vmatprep.subr.mxu0 0.0
  %77 = vmatpush1.msra.mxu0 0.0
  %78 = vmatprep.subr.mxu0 0.0
  %79 = vmatpush1.msra.mxu0 0.0
  %80 = vmatprep.subr.mxu0 0.0
  %81 = vmatpush1.msra.mxu0 0.0
  %82 = vmatprep.subr.mxu0 0.0
  %83 = vmatpush1.msra.mxu0 0.0
  %84 = vmatprep.subr.mxu0 0.0
  %85 = vmatpush1.msra.mxu0 0.0
  %86 = vmatprep.subr.mxu0 0.0
  %87 = vmatpush1.msra.mxu0 0.0
  %88 = vmatprep.subr.mxu0 0.0
  %89 = vmatpush1.msra.mxu0 0.0
  %90 = vmatprep.subr.mxu0 0.0
  %91 = vmatpush1.msra.mxu0 0.0
  %92 = vmatprep.subr.mxu0 0.0
  %93 = vmatpush1.msra.mxu0 0.0
  %94 = vmatprep.subr.mxu0 0.0
  %95 = vmatpush1.msra.mxu0 %v62
  %96 = vmatprep.subr.mxu0 0.0
  %97 = vmatpush2.msra.mxu0 0.0
  %98 = vmatprep.subr.mxu0 0.0
  %99 = vmatpush2.msra.mxu0 0.0
  %100 = vmatprep.subr.mxu0 0.0
  %101 = vmatpush2.msra.mxu0 0.0
  %102 = vmatprep.subr.mxu0 0.0
  %103 = vmatpush2.msra.mxu0 0.0
  %104 = vmatprep.subr.mxu0 0.0
  %105 = vmatpush2.msra.mxu0 0.0
  %106 = vmatprep.subr.mxu0 0.0
  %107 = vmatpush2.msra.mxu0 0.0
  %108 = vmatprep.subr.mxu0 0.0
  %109 = vmatpush2.msra.mxu0 0.0
  %110 = vmatprep.subr.mxu0 0.0
  %111 = vmatpush2.msra.mxu0 0.0
  %112 = vmatprep.subr.mxu0 0.0
  %113 = vmatpush2.msra.mxu0 0.0
  %114 = vmatprep.subr.mxu0 0.0
  %115 = vmatpush2.msra.mxu0 0.0
  %116 = vmatprep.subr.mxu0 0.0
  %117 = vmatpush2.msra.mxu0 0.0
  %118 = vmatprep.subr.mxu0 0.0
  %119 = vmatpush2.msra.mxu0 0.0
  %120 = vmatprep.subr.mxu0 0.0
  %121 = vmatpush2.msra.mxu0 0.0
  %122 = vmatprep.subr.mxu0 0.0
  %123 = vmatpush2.msra.mxu0 0.0
  %124 = vmatprep.subr.mxu0 0.0
  %125 = vmatpush2.msra.mxu0 0.0
  %126 = vmatprep.subr.mxu0 0.0
  %127 = vmatpush2.msra.mxu0 0.0
  %128 = vmatprep.mubr.f32.mxu0 0.0
  %129 = vmatmul.mubr.f32.gmra.mxu0 %v58
  %v130 = vpop.f32.mrf.mxu0
  %v131 = vadd.f32 %v54, %v130
  %v132 = vpop.f32.mrf.mxu0
  %133 = vdwg.mxu0
  %v134 = vmul.f32 %v131, 0.5
  %v135 = vtanh.pop %v134
  %v136 = vmul.f32 %v135, 0.5
  %v137 = vadd.f32 %v136, 0.5
  %vm138 = vcmask 7168
  %139 = vst.msk [vmem:[%s5] sm:$0xff] %vm138, %v137
  // Predicated region
  $region22: #{simplenet_forward.1} parent=0 // pred_check
    _
  $region23: #{simplenet_forward.1} parent=0 // pred_check_branch
    %141 = sbr.rel (0) target = $region25
  $region24: #{simplenet_forward.1} parent=0 // pred_region
    _
  $region25: #{simplenet_forward.1} parent=0 // pred_fallthru
    _
  // Predicated region
  $region26: #{simplenet_forward.1} parent=0 // pred_check
    _
  $region27: #{simplenet_forward.1} parent=0 // pred_check_branch
    %143 = sbr.rel (0) target = $region29
  $region28: #{simplenet_forward.1} parent=0 // pred_region
    _
  $region29: #{simplenet_forward.1} parent=0 // pred_fallthru
    _

</llo_original>
